<compile_context>
chip_gen: v7x
topology: tpu7x:2x2x1
jax: 0.10.0
libtpu: 0.0.40
codegen_flags: <defaults>
</compile_context>

<pallas_src>
from functools import partial

import numpy as np
import jax
import jax.numpy as jnp
from jax.experimental import pallas as pl
from jax.experimental.pallas import tpu as pltpu


def _choose_block_frames(batch, nd, itemsize, target_tile_bytes=4 << 20):
    """Frames per grid step (multiple of 8 sublanes, never exceeding the batch)."""
    if batch <= 8:
        return batch                                    # single block == full batch dim
    by_vmem = (target_tile_bytes // (nd * itemsize)) // 8 * 8   # ~4 MiB input tile
    by_cores = (-(-batch // 2)) // 8 * 8                # aim for >= 2 blocks (v7x megacore)
    by_batch = (batch // 8) * 8                         # stay a multiple of 8 within the array
    return max(8, min(by_vmem, by_cores, by_batch))


@partial(jax.jit, static_argnames=("n_mask",))
def _masked_loss_small(target, predictions, mask_flat, *, n_mask):
    """Fused XLA fallback for tiny B / degenerate N (no Pallas launch)."""
    B, N, D = target.shape
    d = (predictions - target).astype(jnp.float32)
    sq = d * d
    rec_loss = jnp.mean(sq)
    lane_sq = jnp.sum(sq.reshape(B, N * D), axis=0)
    mouth_loss = jnp.sum(lane_sq * mask_flat) / (B * n_mask * D)
    dv = d[:, 1:, :] - d[:, :-1, :]
    vel_loss = jnp.mean(dv * dv)
    return rec_loss + mouth_loss + vel_loss


@partial(jax.jit, static_argnames=("n_mask", "bt"))
def _masked_loss_pallas(target, predictions, mask_flat, *, n_mask, bt):
    B, N, D = target.shape
    ND = N * D

    # Lane-dense layout: fold D into the lane axis (free row-major reshape).
    t2 = target.reshape(B, ND)
    p2 = predictions.reshape(B, ND)

    num_blocks = pl.cdiv(B, bt)
    ragged = (B % bt) != 0          # static: only emit tail masking when needed

    def kernel(t_ref, p_ref, sq_ref, vel_ref):
        d = p_ref[...].astype(jnp.float32) - t_ref[...].astype(jnp.float32)
        if ragged:
            # Tail block: out-of-bounds rows contain garbage -> zero them
            # before squaring (zero rows contribute exactly 0 to every sum).
            b = pl.program_id(0)
            rows_valid = B - b * bt
            row_ids = jax.lax.broadcasted_iota(jnp.int32, (bt, 1), 0)
            d = jnp.where(row_ids < rows_valid, d, 0.0)
        sq = d * d
        # Per-lane partial sums (sublane reduction only); cross-lane reduce,
        # mask dot-product and divisions fuse into the jitted wrapper.
        sq_ref[...] = jnp.sum(sq, axis=0).reshape(sq_ref.shape)
        # Velocity: lane shift by D == vertex shift by 1 in the folded layout.
        dv = d[:, D:] - d[:, :-D]
        vel_ref[...] = jnp.sum(dv * dv, axis=0).reshape(vel_ref.shape)

    # VMEM budget: 2 inputs x 2 pipeline buffers x tile + output buffers + slack.
    itemsize = np.dtype(target.dtype).itemsize
    tile_bytes = bt * ND * itemsize
    out_bytes = (2 * ND - D) * 4
    vmem_budget = 2 * 2 * tile_bytes + 2 * 2 * out_bytes + (4 << 20)
    vmem_limit = int(min(max(vmem_budget, 8 << 20), 48 << 20))   # headroom on v7x (64 MiB VMEM)

    out_sq, out_vel = pl.pallas_call(
        kernel,
        out_shape=(
            jax.ShapeDtypeStruct((num_blocks, 1, ND), jnp.float32),
            jax.ShapeDtypeStruct((num_blocks, 1, ND - D), jnp.float32),
        ),
        grid=(num_blocks,),
        in_specs=[
            pl.BlockSpec((bt, ND), lambda b: (b, 0)),   # target (lane-dense)
            pl.BlockSpec((bt, ND), lambda b: (b, 0)),   # predictions
        ],
        out_specs=(
            pl.BlockSpec((1, 1, ND), lambda b: (b, 0, 0)),       # per-block sq sums
            pl.BlockSpec((1, 1, ND - D), lambda b: (b, 0, 0)),   # per-block vel sums
        ),
        compiler_params=pltpu.CompilerParams(
            dimension_semantics=("parallel",),          # independent blocks -> megacore on v7x
            vmem_limit_bytes=vmem_limit,
        ),
    )(t2, p2)

    lane_sq = jnp.sum(out_sq, axis=(0, 1))                      # (ND,)
    rec_loss = jnp.sum(lane_sq) / (B * N * D)
    mouth_loss = jnp.sum(lane_sq * mask_flat) / (B * n_mask * D)
    vel_loss = jnp.sum(out_vel) / (B * (N - 1) * D)
    return rec_loss + mouth_loss + vel_loss


def masked_loss(target, predictions, dataset_type, masks, *, target_tile_bytes=4 << 20):
    """Equivalent of Masked_Loss.forward(target, predictions, dataset_type)."""
    B, N, D = target.shape
    ND = N * D

    # dataset_type -> vertex-index mask (host-level dispatch, like the PyTorch
    # if-chain; dataset_type is a plain string, never traced).
    key = {"vocaset": "voca", "BIWI": "biwi", "multiface": "multiface"}[dataset_type]
    idx = np.asarray(masks[key]).astype(np.int64).ravel()
    n_mask = int(idx.shape[0])

    # Multiplicity-aware per-coordinate weight over the folded lane axis
    # (matches PyTorch fancy indexing even with duplicate vertex indices).
    mask_flat = np.zeros((ND,), dtype=np.float32)
    np.add.at(mask_flat, (idx[:, None] * D + np.arange(D)[None, :]).ravel(), 1.0)
    mask_flat = jnp.asarray(mask_flat)

    # Tiny clips / degenerate N: a fused XLA expression beats any Pallas launch.
    if B < 8 or N < 2:
        return _masked_loss_small(target, predictions, mask_flat, n_mask=n_mask)

    bt = _choose_block_frames(B, ND, np.dtype(target.dtype).itemsize, target_tile_bytes)
    return _masked_loss_pallas(target, predictions, mask_flat, n_mask=n_mask, bt=bt)


if __name__ == "__main__":
    # Small shapes consistent with the forward: [frames, vertices, 3].
    # B=19 is NOT a multiple of the 8-frame block -> exercises the in-kernel
    # ragged-tail masking (no host-side padding copies anymore).
    B, N, D = 19, 64, 3
    k1, k2 = jax.random.split(jax.random.PRNGKey(0))
    target = jax.random.normal(k1, (B, N, D), dtype=jnp.float32)
    predictions = jax.random.normal(k2, (B, N, D), dtype=jnp.float32)

    # Deterministic synthetic vertex-index masks (module __init__ args).
    voca_mask = np.array([1, 2, 3, 5, 7, 11], dtype=np.int32)
    biwi_mask = np.array([0, 4, 8, 12], dtype=np.int32)
    multiface_mask = np.array([2, 6, 10, 13, 15], dtype=np.int32)
    masks = {"voca": voca_mask, "biwi": biwi_mask, "multiface": multiface_mask}

    # --- Pallas path (f32) ---
    out = masked_loss(target, predictions, "vocaset", masks)
    out = jax.block_until_ready(out)

    # Pure-JAX reference.
    d = predictions - target
    rec = jnp.mean(d * d)
    dm = d[:, voca_mask, :]
    mouth = jnp.mean(dm * dm)
    dv = (predictions[:, 1:, :] - predictions[:, :-1, :]) - (
        target[:, 1:, :] - target[:, :-1, :])
    vel = jnp.mean(dv * dv)
    ref = rec + mouth + vel
    assert np.allclose(np.asarray(out), np.asarray(ref), rtol=1e-5, atol=1e-5), (
        float(out), float(ref))

    # --- Pallas path with bf16 inputs (halved HBM read traffic; f32 accumulation) ---
    out_bf16 = masked_loss(target.astype(jnp.bfloat16),
                           predictions.astype(jnp.bfloat16), "vocaset", masks)
    out_bf16 = jax.block_until_ready(out_bf16)
    assert np.allclose(np.asarray(out_bf16), np.asarray(ref), rtol=5e-2, atol=5e-2), (
        float(out_bf16), float(ref))

    # --- Small-B fallback path (B < 8 frames -> fused XLA, no Pallas launch) ---
    out_small = masked_loss(target[:2], predictions[:2], "BIWI", masks)
    out_small = jax.block_until_ready(out_small)
    d2 = predictions[:2] - target[:2]
    ref_small = (jnp.mean(d2 * d2)
                 + jnp.mean(d2[:, biwi_mask, :] ** 2)
                 + jnp.mean((d2[:, 1:, :] - d2[:, :-1, :]) ** 2))
    assert np.allclose(np.asarray(out_small), np.asarray(ref_small),
                       rtol=1e-5, atol=1e-5), (float(out_small), float(ref_small))

    print("KERNEL_OK")
</pallas_src>

<mosaic_0001>
module attributes {stable_mosaic.version = 11 : i64} {
  func.func @kernel(%arg0: i32, %arg1: memref<8x192xf32, #tpu.memory_space<vmem>>, %arg2: memref<8x192xf32, #tpu.memory_space<vmem>>, %arg3: memref<1x1x192xf32, #tpu.memory_space<vmem>>, %arg4: memref<1x1x189xf32, #tpu.memory_space<vmem>>) attributes {dimension_semantics = [#tpu.dimension_semantics<parallel>], iteration_bounds = array<i64: 3>, scalar_prefetch = 0 : i64, scratch_operands = 0 : i64, tpu.core_type = #tpu.core_type<tc>, window_params = [{transform_indices = @transform_0, window_bounds = array<i64: 8, 192>}, {transform_indices = @transform_1, window_bounds = array<i64: 8, 192>}, {transform_indices = @transform_2, window_bounds = array<i64: 1, 1, 192>}, {transform_indices = @transform_3, window_bounds = array<i64: 1, 1, 189>}]} {
    %c0 = arith.constant 0 : index
    %c0_0 = arith.constant 0 : index
    %0 = vector.load %arg2[%c0, %c0_0] : memref<8x192xf32, #tpu.memory_space<vmem>>, vector<8x192xf32>
    %c0_1 = arith.constant 0 : index
    %c0_2 = arith.constant 0 : index
    %1 = vector.load %arg1[%c0_1, %c0_2] : memref<8x192xf32, #tpu.memory_space<vmem>>, vector<8x192xf32>
    %2 = arith.subf %0, %1 : vector<8x192xf32>
    %c8_i32 = arith.constant 8 : i32
    %3 = arith.muli %arg0, %c8_i32 : i32
    %c19_i32 = arith.constant 19 : i32
    %4 = arith.subi %c19_i32, %3 : i32
    %5 = tpu.iota {dimensions = array<i32: 0>} : vector<8x1xi32>
    %6 = vector.broadcast %4 : i32 to vector<8x1xi32>
    %7 = arith.cmpi slt, %5, %6 : vector<8x1xi32>
    %cst = arith.constant 0.000000e+00 : f32
    %8 = vector.shape_cast %7 : vector<8x1xi1> to vector<8x1xi1>
    %9 = vector.broadcast %8 : vector<8x1xi1> to vector<8x192xi1>
    %10 = vector.broadcast %cst : f32 to vector<8x192xf32>
    %11 = arith.select %9, %2, %10 : vector<8x192xi1>, vector<8x192xf32>
    %12 = arith.mulf %11, %11 : vector<8x192xf32>
    %cst_3 = arith.constant dense<0.000000e+00> : vector<192xf32>
    %13 = vector.multi_reduction <add>, %12, %cst_3 [0] : vector<8x192xf32> to vector<192xf32>
    %14 = vector.shape_cast %13 : vector<192xf32> to vector<1x1x192xf32>
    %c0_4 = arith.constant 0 : index
    %c0_5 = arith.constant 0 : index
    %c0_6 = arith.constant 0 : index
    %15 = vector.load %arg3[%c0_4, %c0_5, %c0_6] : memref<1x1x192xf32, #tpu.memory_space<vmem>>, vector<1x1x192xf32>
    tpu.vector_store %arg3[%c0_4, %c0_5, %c0_6], %14 {strides = array<i32>} : memref<1x1x192xf32, #tpu.memory_space<vmem>>, vector<1x1x192xf32>,
    %16 = vector.extract_strided_slice %11 {offsets = [0, 3], sizes = [8, 189], strides = [1, 1]} : vector<8x192xf32> to vector<8x189xf32>
    %17 = vector.extract_strided_slice %11 {offsets = [0, 0], sizes = [8, 189], strides = [1, 1]} : vector<8x192xf32> to vector<8x189xf32>
    %18 = arith.subf %16, %17 : vector<8x189xf32>
    %19 = arith.mulf %18, %18 : vector<8x189xf32>
    %cst_7 = arith.constant dense<0.000000e+00> : vector<189xf32>
    %20 = vector.multi_reduction <add>, %19, %cst_7 [0] : vector<8x189xf32> to vector<189xf32>
    %21 = vector.shape_cast %20 : vector<189xf32> to vector<1x1x189xf32>
    %c0_8 = arith.constant 0 : index
    %c0_9 = arith.constant 0 : index
    %c0_10 = arith.constant 0 : index
    %22 = vector.load %arg4[%c0_8, %c0_9, %c0_10] : memref<1x1x189xf32, #tpu.memory_space<vmem>>, vector<1x1x189xf32>
    tpu.vector_store %arg4[%c0_8, %c0_9, %c0_10], %21 {strides = array<i32>} : memref<1x1x189xf32, #tpu.memory_space<vmem>>, vector<1x1x189xf32>,
    return
  }
  func.func @transform_0(%arg0: i32) -> (i32, i32) {
    %c0_i32 = arith.constant 0 : i32
    %c0_i32_0 = arith.constant 0 : i32
    return %arg0, %c0_i32 : i32, i32
  }
  func.func @transform_1(%arg0: i32) -> (i32, i32) {
    %c0_i32 = arith.constant 0 : i32
    %c0_i32_0 = arith.constant 0 : i32
    return %arg0, %c0_i32 : i32, i32
  }
  func.func @transform_2(%arg0: i32) -> (i32, i32, i32) {
    %c0_i32 = arith.constant 0 : i32
    %c0_i32_0 = arith.constant 0 : i32
    %c0_i32_1 = arith.constant 0 : i32
    return %arg0, %c0_i32, %c0_i32_0 : i32, i32, i32
  }
  func.func @transform_3(%arg0: i32) -> (i32, i32, i32) {
    %c0_i32 = arith.constant 0 : i32
    %c0_i32_0 = arith.constant 0 : i32
    %c0_i32_1 = arith.constant 0 : i32
    return %arg0, %c0_i32, %c0_i32_0 : i32, i32, i32
  }
}

</mosaic_0001>

<llo_original>
// kernel: _masked_loss_pallas.1
$region0: #{_masked_loss_pallas.1}
  #allocation0 [shape = 'u32[]', space=smem, size = 0x4, offset = 0x4, fixed_abs, tag = 'smem constant byte address 0x4 - core index']
  #allocation1 [shape = 'u32[144,128]{1,0:T(1,128)}', space=vmem, size = 0x12000, scoped, tag = 'internal scratch']
  %s0 = inlined_call_operand.vmem [shape: f32[19,192], index: 0, kind: input, shape index: {}]
  %s1 = inlined_call_operand.vmem [shape: f32[19,192], index: 1, kind: input, shape index: {}]
  %s2 = inlined_call_operand.vmem [shape: f32[3,1,192], index: 2, kind: output, shape index: {0}]
  %s3 = inlined_call_operand.vmem [shape: f32[3,1,189], index: 3, kind: output, shape index: {1}]
  %4 = xla_tuple %s2, %s3
  %s5 = sld [smem:[#allocation0]]
  $region49: #{_masked_loss_pallas.1} parent=0
    _
  %s7 = ssub.s32 1, %s5
  %s8 = scalar_select 0, %s7, %s5
  loop: start=0, step=1, limit=5
  $region2: #{_masked_loss_pallas.1} parent=0 // loop_pre_header
    _
  $region3: #{_masked_loss_pallas.1} parent=0 // loop_header
    %s10 = sphi 0, %s14
    %p11 = scmp.ge.s32.totalorder %s10, 5
    %s20 = sphi 0, %s22
    %s23 = sphi 0, %s20
    %s24 = sphi 0, %s23
    %s40 = sphi 0, %s24
    %s46 = sphi 0, %s48
    %s49 = sphi 0, %s46
    %s50 = sphi 0, %s49
    %s66 = sphi 0, %s50
    %s72 = sphi 0, %s74
    %s75 = sphi 0, %s72
    %s76 = sphi 0, %s75
    %s92 = sphi 0, %s76
    %s98 = sphi 0, %s100
    %s101 = sphi 0, %s98
    %s102 = sphi 0, %s101
    %s118 = sphi 0, %s102
  $region4: #{_masked_loss_pallas.1} parent=0 // loop_header_branch
    %13 = sbr.rel (%p11) target = $region8
  $region5: #{_masked_loss_pallas.1} parent=0 // loop_body
    %s15 = ssub.s32 %s10, 1
    %s16 = ssub.s32 %s10, 2
    %s17 = sadd.s32 %s10, 1
    %s18 = ssub.s32 %s10, %s17
    %p19 = scmp.eq.s32.totalorder %s18, 0
    %s21 = sadd.s32 %s20, 1
    %s22 = scalar_select %p19, %s20, %s21
    %p25 = pneg %p19
    %p26 = scmp.eq.s32.totalorder %s10, 2
    %p27 = por %p25, %p26
    %p28 = scmp.ne.s32.totalorder %s20, %s23
    %p29 = scmp.eq.s32.totalorder %s10, 0
    %p30 = por %p28, %p29
    %p31 = scmp.ne.s32.totalorder %s20, %s23
    %p32 = scmp.eq.s32.totalorder %s15, 2
    %p33 = por %p31, %p32
    %p34 = scmp.ne.s32.totalorder %s23, %s24
    %p35 = scmp.eq.s32.totalorder %s15, 0
    %p36 = por %p34, %p35
    %p37 = scmp.ne.s32.totalorder %s23, %s24
    %p38 = scmp.eq.s32.totalorder %s16, 2
    %p39 = por %p37, %p38
    %p41 = scmp.ne.s32.totalorder %s24, %s40
    %p42 = scmp.eq.s32.totalorder %s16, 0
    %p43 = por %p41, %p42
    %s44 = ssub.s32 %s10, %s17
    %p45 = scmp.eq.s32.totalorder %s44, 0
    %s47 = sadd.s32 %s46, 1
    %s48 = scalar_select %p45, %s46, %s47
    %p51 = pneg %p45
    %p52 = scmp.eq.s32.totalorder %s10, 2
    %p53 = por %p51, %p52
    %p54 = scmp.ne.s32.totalorder %s46, %s49
    %p55 = scmp.eq.s32.totalorder %s10, 0
    %p56 = por %p54, %p55
    %p57 = scmp.ne.s32.totalorder %s46, %s49
    %p58 = scmp.eq.s32.totalorder %s15, 2
    %p59 = por %p57, %p58
    %p60 = scmp.ne.s32.totalorder %s49, %s50
    %p61 = scmp.eq.s32.totalorder %s15, 0
    %p62 = por %p60, %p61
    %p63 = scmp.ne.s32.totalorder %s49, %s50
    %p64 = scmp.eq.s32.totalorder %s16, 2
    %p65 = por %p63, %p64
    %p67 = scmp.ne.s32.totalorder %s50, %s66
    %p68 = scmp.eq.s32.totalorder %s16, 0
    %p69 = por %p67, %p68
    %s70 = ssub.s32 %s10, %s17
    %p71 = scmp.eq.s32.totalorder %s70, 0
    %s73 = sadd.s32 %s72, 1
    %s74 = scalar_select %p71, %s72, %s73
    %p77 = pneg %p71
    %p78 = scmp.eq.s32.totalorder %s10, 2
    %p79 = por %p77, %p78
    %p80 = scmp.ne.s32.totalorder %s72, %s75
    %p81 = scmp.eq.s32.totalorder %s10, 0
    %p82 = por %p80, %p81
    %p83 = scmp.ne.s32.totalorder %s72, %s75
    %p84 = scmp.eq.s32.totalorder %s15, 2
    %p85 = por %p83, %p84
    %p86 = scmp.ne.s32.totalorder %s75, %s76
    %p87 = scmp.eq.s32.totalorder %s15, 0
    %p88 = por %p86, %p87
    %p89 = scmp.ne.s32.totalorder %s75, %s76
    %p90 = scmp.eq.s32.totalorder %s16, 2
    %p91 = por %p89, %p90
    %p93 = scmp.ne.s32.totalorder %s76, %s92
    %p94 = scmp.eq.s32.totalorder %s16, 0
    %p95 = por %p93, %p94
    %s96 = ssub.s32 %s10, %s17
    %p97 = scmp.eq.s32.totalorder %s96, 0
    %s99 = sadd.s32 %s98, 1
    %s100 = scalar_select %p97, %s98, %s99
    %p103 = pneg %p97
    %p104 = scmp.eq.s32.totalorder %s10, 2
    %p105 = por %p103, %p104
    %p106 = scmp.ne.s32.totalorder %s98, %s101
    %p107 = scmp.eq.s32.totalorder %s10, 0
    %p108 = por %p106, %p107
    %p109 = scmp.ne.s32.totalorder %s98, %s101
    %p110 = scmp.eq.s32.totalorder %s15, 2
    %p111 = por %p109, %p110
    %p112 = scmp.ne.s32.totalorder %s101, %s102
    %p113 = scmp.eq.s32.totalorder %s15, 0
    %p114 = por %p112, %p113
    %p115 = scmp.ne.s32.totalorder %s101, %s102
    %p116 = scmp.eq.s32.totalorder %s16, 2
    %p117 = por %p115, %p116
    %p119 = scmp.ne.s32.totalorder %s102, %s118
    %p120 = scmp.eq.s32.totalorder %s16, 0
    %p121 = por %p119, %p120
    %p122 = scmp.le.s32.totalorder 1, %s10
    %p123 = scmp.lt.s32.totalorder %s10, 4
    %p124 = pnand %p122, %p123
    %p125 = pneg %p124
    // Predicated region
    $region9: #{_masked_loss_pallas.1} parent=5 // pred_check
      _
    $region10: #{_masked_loss_pallas.1} parent=5 // pred_check_branch
      %127 = sbr.rel (%p124) target = $region12
    $region11: #{_masked_loss_pallas.1} parent=5 // pred_region
      %s128 = ssub.s32 %s10, 1
    $region12: #{_masked_loss_pallas.1} parent=5 // pred_fallthru
      _
    %p129 = scmp.lt.s32.totalorder %s10, 3
    // Predicated region
    $region13: #{_masked_loss_pallas.1} parent=5 // pred_check
      %p130 = pneg %p129
    $region14: #{_masked_loss_pallas.1} parent=5 // pred_check_branch
      %132 = sbr.rel (%p130) target = $region16
    $region15: #{_masked_loss_pallas.1} parent=5 // pred_region
      // Predicated region
      $region17: #{_masked_loss_pallas.1} parent=15 // pred_check
        %p133 = pneg %p30
      $region18: #{_masked_loss_pallas.1} parent=15 // pred_check_branch
        %135 = sbr.rel (%p133) target = $region20
      $region19: #{_masked_loss_pallas.1} parent=15 // pred_region
        %p136 = scmp.lt.s32.totalorder %s10, 2
        %s137 = scalar_select %p136, %s10, 2
        %s138 = smul.addr %s137, 2
        %s139 = smul.addr %s138, 8
        %s140 = scalar_lea.vmem %s0, %s139
      $region20: #{_masked_loss_pallas.1} parent=15 // pred_fallthru
        _
      // Predicated region
      $region21: #{_masked_loss_pallas.1} parent=15 // pred_check
        %p141 = pneg %p56
      $region22: #{_masked_loss_pallas.1} parent=15 // pred_check_branch
        %143 = sbr.rel (%p141) target = $region24
      $region23: #{_masked_loss_pallas.1} parent=15 // pred_region
        %p144 = scmp.lt.s32.totalorder %s10, 2
        %s145 = scalar_select %p144, %s10, 2
        %s146 = smul.addr %s145, 2
        %s147 = smul.addr %s146, 8
        %s148 = scalar_lea.vmem %s1, %s147
      $region24: #{_masked_loss_pallas.1} parent=15 // pred_fallthru
        _
    $region16: #{_masked_loss_pallas.1} parent=5 // pred_fallthru
      _
    %p149 = scmp.le.s32.totalorder 1, %s10
    %p150 = scmp.lt.s32.totalorder %s10, 4
    %p151 = pnand %p149, %p150
    %p152 = pneg %p151
    // Predicated region
    $region25: #{_masked_loss_pallas.1} parent=5 // pred_check
      _
    $region26: #{_masked_loss_pallas.1} parent=5 // pred_check_branch
      %154 = sbr.rel (%p151) target = $region28
    $region27: #{_masked_loss_pallas.1} parent=5 // pred_region
      %s155 = ssub.s32 %s10, 1
      %p156 = scmp.lt.s32.totalorder %s15, 2
      %s157 = scalar_select %p156, %s15, 2
      %s158 = smul.addr %s157, 2
      %s159 = smul.addr %s158, 8
      %s160 = scalar_lea.vmem %s0, %s159
      %p161 = pneg %p36
      %p162 = pneg %p33
      %p163 = scmp.lt.s32.totalorder %s15, 2
      %s164 = scalar_select %p163, %s15, 2
      %s165 = smul.addr %s164, 2
      %s166 = smul.addr %s165, 8
      %s167 = scalar_lea.vmem %s1, %s166
      %p168 = pneg %p62
      %p169 = pneg %p59
      %p170 = pneg %p88
      %p171 = pneg %p85
      %p172 = scmp.lt.s32.totalorder %s15, 2
      %s173 = scalar_select %p172, %s15, 2
      %s174 = smul.addr %s173, 2
      %s175 = scalar_lea.vmem %s2, %s174
      %p176 = pneg %p114
      %p177 = pneg %p111
      %p178 = scmp.lt.s32.totalorder %s15, 2
      %s179 = scalar_select %p178, %s15, 2
      %s180 = smul.addr %s179, 2
      %s181 = scalar_lea.vmem %s3, %s180
      %p182 = scmp.lt.s32.totalorder %s15, 2
      %s183 = scalar_select %p182, %s15, 2
      %s184 = smul.addr %s183, 2
      %s185 = smul.addr %s184, 8
      %s186 = scalar_lea.vmem %s0, %s185
      %p187 = scmp.lt.s32.totalorder %s15, 2
      %s188 = scalar_select %p187, %s15, 2
      %s189 = smul.addr %s188, 2
      %s190 = smul.addr %s189, 8
      %s191 = scalar_lea.vmem %s1, %s190
      %p192 = scmp.lt.s32.totalorder %s15, 2
      %s193 = scalar_select %p192, %s15, 2
      %s194 = smul.addr %s193, 2
      %s195 = scalar_lea.vmem %s2, %s194
      %p196 = scmp.lt.s32.totalorder %s15, 2
      %s197 = scalar_select %p196, %s15, 2
      %s198 = smul.addr %s197, 2
      %s199 = scalar_lea.vmem %s3, %s198
      %v200 = vld [vmem:[%s191] sm:$0xff]
      %v201 = vld [vmem:[%s191 + $0x8] sm:$0xff]
      %v202 = vld [vmem:[%s186] sm:$0xff]
      %v203 = vld [vmem:[%s186 + $0x8] sm:$0xff]
      %v204 = vsub.f32 %v200, %v202
      %v205 = vsub.f32 %v201, %v203
      %s206 = smul.u32 %s15, 8
      %s207 = ssub.s32 19, %s206
      %v208 = vlaneseq
      %v209 = vshrl.u32 %v208, 7
      %v210 = vstv %s207
      %vm211 = vcmp.lt.s32.totalorder %v209, %v210
      %v212 = vsel %vm211, 1, 0
      %vm213 = vcmp.eq.s32.totalorder %v212, 1
      %v214 = vsel %vm213, %v204, 0.0
      %v215 = vsel %vm213, %v205, 0.0
      %v216 = vmul.f32 %v214, %v214
      %v217 = vmul.f32 %v215, %v215
      %v218 = vrot.slane %v216, 4
      %v219 = vadd.f32 %v216, %v218
      %v220 = vrot.slane %v219, 2
      %v221 = vadd.f32 %v219, %v220
      %v222 = vrot.slane %v221, 1
      %v223 = vadd.f32 %v221, %v222
      %vm224 = vcmask 523264
      %v225 = vsel %vm224, %v217, 0.0
      %v226 = vrot.slane %v225, 4
      %v227 = vadd.f32 %v225, %v226
      %v228 = vrot.slane %v227, 2
      %v229 = vadd.f32 %v227, %v228
      %v230 = vrot.slane %v229, 1
      %v231 = vadd.f32 %v229, %v230
      %v234 = vcombine.low %v223, %v231
      %v236 = vunpack.c.l.s4 1966171168
      %v237 = vunpack.c.0.s8 %v236
      %v238 = vlaneseq
      %v239 = vshrl.u32 %v238, 7
      %v240 = vsub.s32 %v237, %v239
      %v241 = vrot.slane %v234, %v240
      %v243 = vunpack.c.l.s4 1966171168
      %v244 = vunpack.c.0.s8 %v243
      %v245 = vlaneseq
      %v246 = vshrl.u32 %v245, 7
      %v247 = vsub.s32 %v244, %v246
      %v248 = vrot.slane %v241, %v247
      %v250 = vlaneseq
      %vm251 = vcmp.ge.s32.totalorder %v250, 0
      %vm252 = vcmp.lt.s32.totalorder %v250, 192
      %vm253 = vmand %vm251, %vm252
      %254 = vst.msk [vmem:[%s195] sm:$0x3] %vm253, %v248
      %257 = vrot.lane.b32.xlu0 %v214, 3
      %v258 = vpop.permute.xlu0 %257
      %259 = vrot.lane.b32.xlu0 %v215, 3
      %v260 = vpop.permute.xlu0 %259
      %vm261 = vcmask 23552
      %v262 = vsel %vm261, %v258, %v260
      %v265 = vsub.f32 %v214, %v258
      %v266 = vsub.f32 %v215, %v262
      %v267 = vmul.f32 %v265, %v265
      %v268 = vmul.f32 %v266, %v266
      %vm269 = vcmask 1047576
      %v270 = vsel %vm269, %v267, 0.0
      %v271 = vrot.slane %v270, 4
      %v272 = vadd.f32 %v270, %v271
      %v273 = vrot.slane %v272, 2
      %v274 = vadd.f32 %v272, %v273
      %v275 = vrot.slane %v274, 1
      %v276 = vadd.f32 %v274, %v275
      %v277 = vsel %vm224, %v268, 0.0
      %v278 = vrot.slane %v277, 4
      %v279 = vadd.f32 %v277, %v278
      %v280 = vrot.slane %v279, 2
      %v281 = vadd.f32 %v279, %v280
      %v282 = vrot.slane %v281, 1
      %v283 = vadd.f32 %v281, %v282
      %v286 = vcombine.low %v276, %v283
      %v288 = vunpack.c.l.s4 1966171168
      %v289 = vunpack.c.0.s8 %v288
      %v290 = vlaneseq
      %v291 = vshrl.u32 %v290, 7
      %v292 = vsub.s32 %v289, %v291
      %v293 = vrot.slane %v286, %v292
      %v295 = vunpack.c.l.s4 1966171168
      %v296 = vunpack.c.0.s8 %v295
      %v297 = vlaneseq
      %v298 = vshrl.u32 %v297, 7
      %v299 = vsub.s32 %v296, %v298
      %v300 = vrot.slane %v293, %v299
      %301 = vrot.lane.b32.xlu0 %v300, 125
      %v302 = vpop.permute.xlu0 %301
      %v303 = vrot.slane %v302, 1
      %vm304 = vcmask 1022976
      %v305 = vsel %vm304, %v302, %v303
      %vm307 = vcmp.lt.s32.totalorder %v250, 189
      %vm308 = vmand %vm251, %vm307
      %309 = vst.msk [vmem:[%s199] sm:$0x3] %vm308, %v305
      %p310 = scmp.lt.s32.totalorder %s15, 2
      %s311 = scalar_select %p310, %s15, 2
      %s312 = smul.addr %s311, 2
      %s313 = scalar_lea.vmem %s2, %s312
      %p314 = scmp.lt.s32.totalorder %s15, 2
      %s315 = scalar_select %p314, %s15, 2
      %s316 = smul.addr %s315, 2
      %s317 = scalar_lea.vmem %s3, %s316
      // Predicated region
      $region29: #{_masked_loss_pallas.1} parent=27 // pred_check
        %p318 = pneg %p85
      $region30: #{_masked_loss_pallas.1} parent=27 // pred_check_branch
        %320 = sbr.rel (%p318) target = $region32
      $region31: #{_masked_loss_pallas.1} parent=27 // pred_region
        _
      $region32: #{_masked_loss_pallas.1} parent=27 // pred_fallthru
        _
      // Predicated region
      $region33: #{_masked_loss_pallas.1} parent=27 // pred_check
        %p321 = pneg %p111
      $region34: #{_masked_loss_pallas.1} parent=27 // pred_check_branch
        %323 = sbr.rel (%p321) target = $region36
      $region35: #{_masked_loss_pallas.1} parent=27 // pred_region
        _
      $region36: #{_masked_loss_pallas.1} parent=27 // pred_fallthru
        _
    $region28: #{_masked_loss_pallas.1} parent=5 // pred_fallthru
      _
    %p324 = scmp.le.s32.totalorder 2, %s10
    // Predicated region
    $region37: #{_masked_loss_pallas.1} parent=5 // pred_check
      %p325 = pneg %p324
    $region38: #{_masked_loss_pallas.1} parent=5 // pred_check_branch
      %327 = sbr.rel (%p325) target = $region40
    $region39: #{_masked_loss_pallas.1} parent=5 // pred_region
      %s328 = ssub.s32 %s10, 2
      // Predicated region
      $region41: #{_masked_loss_pallas.1} parent=39 // pred_check
        %p329 = pneg %p91
      $region42: #{_masked_loss_pallas.1} parent=39 // pred_check_branch
        %331 = sbr.rel (%p329) target = $region44
      $region43: #{_masked_loss_pallas.1} parent=39 // pred_region
        %p332 = scmp.lt.s32.totalorder %s16, 2
        %s333 = scalar_select %p332, %s16, 2
        %s334 = smul.addr %s333, 2
        %s335 = scalar_lea.vmem %s2, %s334
      $region44: #{_masked_loss_pallas.1} parent=39 // pred_fallthru
        _
      // Predicated region
      $region45: #{_masked_loss_pallas.1} parent=39 // pred_check
        %p336 = pneg %p117
      $region46: #{_masked_loss_pallas.1} parent=39 // pred_check_branch
        %338 = sbr.rel (%p336) target = $region48
      $region47: #{_masked_loss_pallas.1} parent=39 // pred_region
        %p339 = scmp.lt.s32.totalorder %s16, 2
        %s340 = scalar_select %p339, %s16, 2
        %s341 = smul.addr %s340, 2
        %s342 = scalar_lea.vmem %s3, %s341
      $region48: #{_masked_loss_pallas.1} parent=39 // pred_fallthru
        _
    $region40: #{_masked_loss_pallas.1} parent=5 // pred_fallthru
      _
  $region6: #{_masked_loss_pallas.1} parent=0 // loop_footer
    %s14 = sadd.s32 1, %s10
  $region7: #{_masked_loss_pallas.1} parent=0 // loop_footer_branch
    %9 = sbr.rel target = $region3
  $region8: #{_masked_loss_pallas.1} parent=0 // loop_exit
    _

</llo_original>
